<compile_context>
chip_gen: v7x
topology: tpu7x:2x2x1
jax: 0.10.0
libtpu: 0.0.40
codegen_flags: <defaults>
</compile_context>

<pallas_src>
import functools

import jax
import jax.numpy as jnp
from jax.experimental import pallas as pl
from jax.experimental.pallas import tpu as pltpu


def _dice_sums_kernel(x_ref, t_ref, inter_out_ref, union_out_ref,
                      inter_acc, union_acc, *,
                      hw, tile_elems, tiles_per_split, n_real_tiles,
                      mask_tail_tile, has_phantom_tiles):
    """Accumulate per-class softmax/one-hot sums for one (batch, split) slice.

    x_ref:     (C, S, 128) or (C, T)   logits block (class axis leading).
    t_ref:     (1, S, 128) or (1, T)   int labels block.
    *_out_ref: (C, 1) per-(batch, split) reduced sums, written on the last tile.
    *_acc:     f32 VMEM scratch accumulators, same spatial shape as the block.
    """
    j = pl.program_id(2)                          # tile index within this split
    g = pl.program_id(1) * tiles_per_split + j    # global spatial tile index

    @pl.when(j == 0)
    def _init():
        inter_acc[...] = jnp.zeros_like(inter_acc)
        union_acc[...] = jnp.zeros_like(union_acc)

    def accumulate(mask_tail):
        x = x_ref[...].astype(jnp.float32)        # (C, ...spatial)
        t = t_ref[...].astype(jnp.int32)          # (1, ...spatial)

        valid = None
        if mask_tail:
            # Flat position of every element inside this tile.
            pos = jnp.zeros(x.shape, jnp.int32)
            stride = 1
            for ax in range(x.ndim - 1, 0, -1):
                pos = pos + jax.lax.broadcasted_iota(jnp.int32, x.shape, ax) * stride
                stride *= x.shape[ax]
            valid = (g * tile_elems + pos) < hw
            # where() (not multiply-by-mask) so padded NaN/Inf never propagates.
            x = jnp.where(valid, x, 0.0)

        # Softmax over the class axis (axis 0) == F.softmax(inputs, dim=1).
        m = jnp.max(x, axis=0, keepdims=True)
        e = jnp.exp(x - m)
        # approx=True would move the divide to the otherwise-idle EUP slot, but
        # its ~1e-4 relative error exceeds the 1e-5 check tolerance -> exact.
        p = e * pl.reciprocal(jnp.sum(e, axis=0, keepdims=True), approx=False)

        # One-hot targets via class-axis iota compared against the label row.
        class_ids = jax.lax.broadcasted_iota(jnp.int32, x.shape, 0)
        eq = class_ids == t                       # bool (C, ...spatial)
        if mask_tail:
            eq = jnp.logical_and(eq, valid)
            p = jnp.where(valid, p, 0.0)

        # Pure elementwise, full-lane-width accumulation into VMEM scratch.
        inter_acc[...] += jnp.where(eq, p, 0.0)
        union_acc[...] += p + eq.astype(jnp.float32)

    if not (mask_tail_tile or has_phantom_tiles):
        # Every tile is full: no masking work anywhere (common aligned case).
        accumulate(mask_tail=False)
    elif mask_tail_tile:
        @pl.when(g < n_real_tiles - 1)
        def _full():
            accumulate(mask_tail=False)

        @pl.when(g == n_real_tiles - 1)
        def _tail():
            accumulate(mask_tail=True)
        # g > n_real_tiles - 1 (phantom tiles from the spatial split): skipped.
    else:
        @pl.when(g < n_real_tiles)                # only phantom tiles to skip
        def _real():
            accumulate(mask_tail=False)

    @pl.when(j == pl.num_programs(2) - 1)
    def _finalize():
        # One XLU reduction per (batch, split), amortized over all tiles; only
        # a (C, 1) result hits HBM.
        r_i = inter_acc[...]
        r_u = union_acc[...]
        while r_i.ndim > 2:
            r_i = jnp.sum(r_i, axis=-1)
            r_u = jnp.sum(r_u, axis=-1)
        inter_out_ref[...] = jnp.sum(r_i, axis=-1, keepdims=True)
        union_out_ref[...] = jnp.sum(r_u, axis=-1, keepdims=True)


def _plan_spatial_tiling(hw, c, x_bytes, vmem_budget_bytes):
    """Choose (dense_layout, tile_elems, sublane_tile) under a VMEM budget.

    VMEM per spatial element = double-buffered (logits + labels) input blocks
    plus the two single-buffered f32 scratch accumulators.
    """
    per_elem = 2 * (c * x_bytes + 4) + 2 * c * 4
    budget_elems = max(128, vmem_budget_bytes // per_elem)

    if hw % 128 == 0:
        n_sub = hw // 128
        if budget_elems >= hw:
            s_tile = n_sub                        # single full-extent block
        else:
            # Multiple of 32 sublane-rows keeps the block legal for
            # f32/bf16/int8 minor-tile rules on every generation.
            s_tile = max(32, (budget_elems // (128 * 32)) * 32)
            s_tile = min(s_tile, n_sub)
        return True, s_tile * 128, s_tile

    if budget_elems >= hw:
        return False, hw, None                    # single full-extent block
    return False, max(128, (budget_elems // 128) * 128), None


def dice_loss(inputs, targets, smooth=1.0, ignore_index=None, *,
              vmem_budget_bytes=20 * 1024 * 1024, spatial_splits=None):
    """Pallas TPU implementation of DiceLoss.forward (ignore_index=None).

    `inputs` may be f32 or bf16 (bf16 is read as-is from HBM and upcast in
    VMEM).  `vmem_budget_bytes` bounds the resident working set; the default
    yields ~4 MiB input tiles and stays well under v7x's 64 MiB VMEM per core.
    """
    if ignore_index is not None:
        # TODO(synk): ignore_index masking path not implemented (module default is None).
        raise NotImplementedError("ignore_index is not supported in this kernel")

    n, c, h, w = inputs.shape
    hw = h * w
    x_bytes = jnp.dtype(inputs.dtype).itemsize

    if targets.dtype != jnp.int32:
        # TODO(synk): int16/int8 label pass-through (small HBM saving) not wired up.
        targets = targets.astype(jnp.int32)

    dense, tile_elems, s_tile = _plan_spatial_tiling(hw, c, x_bytes, vmem_budget_bytes)
    n_real_tiles = pl.cdiv(hw, tile_elems)
    mask_tail_tile = (hw % tile_elems) != 0

    # Optional spatial split: gives v7x's 2nd TensorCore work when N is small.
    if spatial_splits is None:
        spatial_splits = 2 if (n == 1 and n_real_tiles >= 2) else 1
    spatial_splits = max(1, min(spatial_splits, n_real_tiles))
    tiles_per_split = pl.cdiv(n_real_tiles, spatial_splits)
    has_phantom_tiles = spatial_splits * tiles_per_split != n_real_tiles

    if has_phantom_tiles:
        def tile_idx(s, j):
            return jnp.minimum(s * tiles_per_split + j, n_real_tiles - 1)
    else:
        def tile_idx(s, j):
            return s * tiles_per_split + j

    if dense:
        # (N, C, HW) viewed as (N, C, HW/128, 128): class axis leading/non-minor,
        # spatial tiles are fully dense (S sublanes x 128 lanes) even for C < 8.
        n_sub = hw // 128
        x_arr = inputs.reshape(n, c, n_sub, 128)          # free reshape
        t_arr = targets.reshape(n, 1, n_sub, 128)
        in_specs = [
            pl.BlockSpec((None, c, s_tile, 128), lambda b, s, j: (b, 0, tile_idx(s, j), 0)),
            pl.BlockSpec((None, 1, s_tile, 128), lambda b, s, j: (b, 0, tile_idx(s, j), 0)),
        ]
        acc_shape = (c, s_tile, 128)
    else:
        # HW not lane-aligned: fall back to the (C, T) sublane layout.
        x_arr = inputs.reshape(n, c, hw)
        t_arr = targets.reshape(n, 1, hw)
        in_specs = [
            pl.BlockSpec((None, c, tile_elems), lambda b, s, j: (b, 0, tile_idx(s, j))),
            pl.BlockSpec((None, 1, tile_elems), lambda b, s, j: (b, 0, tile_idx(s, j))),
        ]
        acc_shape = (c, tile_elems)

    out_specs = [
        pl.BlockSpec((None, None, c, 1), lambda b, s, j: (b, s, 0, 0)),
        pl.BlockSpec((None, None, c, 1), lambda b, s, j: (b, s, 0, 0)),
    ]
    out_shape = (
        jax.ShapeDtypeStruct((n, spatial_splits, c, 1), jnp.float32),
        jax.ShapeDtypeStruct((n, spatial_splits, c, 1), jnp.float32),
    )

    kernel = functools.partial(
        _dice_sums_kernel,
        hw=hw, tile_elems=tile_elems, tiles_per_split=tiles_per_split,
        n_real_tiles=n_real_tiles, mask_tail_tile=mask_tail_tile,
        has_phantom_tiles=has_phantom_tiles)

    # Working set: double-buffered input blocks + two f32 scratch accumulators.
    vmem_need = (2 * tile_elems * (c * x_bytes + 4)
                 + 2 * c * tile_elems * 4 + (1 << 20))
    vmem_limit = int(min(max(vmem_need * 5 // 4, 32 * 1024 * 1024),
                         56 * 1024 * 1024))          # stays under v7x 64 MiB/TC

    cost = pl.CostEstimate(
        flops=int(10 * n * hw * c),
        transcendentals=int(n * hw * c),
        bytes_accessed=int(n * hw * (c * x_bytes + 4)
                           + 2 * n * spatial_splits * c * 4),
    )

    inter_parts, union_parts = pl.pallas_call(
        kernel,
        out_shape=out_shape,
        grid_spec=pltpu.PrefetchScalarGridSpec(
            num_scalar_prefetch=0,
            grid=(n, spatial_splits, tiles_per_split),
            in_specs=in_specs,
            out_specs=out_specs,
            scratch_shapes=[pltpu.VMEM(acc_shape, jnp.float32),
                            pltpu.VMEM(acc_shape, jnp.float32)],
        ),
        compiler_params=pltpu.CompilerParams(
            # Batch/split axes "parallel" (megacore split on v7x; per-(b, s)
            # outputs keep the cores write-disjoint); the spatial tile axis is
            # the sequential reduction.
            dimension_semantics=("parallel", "parallel", "arbitrary"),
            vmem_limit_bytes=vmem_limit,
        ),
        cost_estimate=cost,
    )(x_arr, t_arr)

    # Tiny final reductions + dice arithmetic in plain JAX.
    inter = jnp.sum(inter_parts, axis=(0, 1, 3))      # (C,)
    union = jnp.sum(union_parts, axis=(0, 1, 3))      # (C,)
    dice = (2.0 * inter + smooth) / (union + smooth)
    return 1.0 - jnp.mean(dice)


def _dice_loss_ref(inputs, targets, smooth=1.0):
    # Pure-JAX reference of the PyTorch forward, for sanity only.
    p = jax.nn.softmax(inputs.astype(jnp.float32), axis=1)
    onehot = jax.nn.one_hot(targets, inputs.shape[1], axis=1, dtype=jnp.float32)
    dims = (0, 2, 3)
    inter = jnp.sum(p * onehot, axis=dims)
    union = jnp.sum(p + onehot, axis=dims)
    dice = (2.0 * inter + smooth) / (union + smooth)
    return 1.0 - jnp.mean(dice)


if __name__ == "__main__":
    key = jax.random.PRNGKey(0)
    k1, k2, k3, k4, k5, k6 = jax.random.split(key, 6)

    # 1) Primary: module-consistent small shape (dense lane-aligned layout,
    #    single tile per batch).
    N, C, H, W = 2, 4, 16, 16
    logits = jax.random.normal(k1, (N, C, H, W), dtype=jnp.float32)
    labels = jax.random.randint(k2, (N, H, W), 0, C, dtype=jnp.int32)
    loss = jax.block_until_ready(dice_loss(logits, labels, smooth=1.0))
    ref = jax.block_until_ready(_dice_loss_ref(logits, labels, smooth=1.0))
    assert jnp.allclose(loss, ref, atol=1e-5, rtol=1e-5), (loss, ref)

    # 2) Non-lane-aligned HW + tiny forced tiles + N=1: exercises the (C, T)
    #    fallback layout, multi-tile accumulation, the masked last tile, and
    #    the 2-way spatial split (including a skipped phantom tile).
    N2, C2, H2, W2 = 1, 4, 16, 20
    logits2 = jax.random.normal(k3, (N2, C2, H2, W2), dtype=jnp.float32)
    labels2 = jax.random.randint(k4, (N2, H2, W2), 0, C2, dtype=jnp.int32)
    loss2 = jax.block_until_ready(
        dice_loss(logits2, labels2, smooth=1.0, vmem_budget_bytes=16 * 1024))
    ref2 = jax.block_until_ready(_dice_loss_ref(logits2, labels2, smooth=1.0))
    assert jnp.allclose(loss2, ref2, atol=1e-5, rtol=1e-5), (loss2, ref2)

    # 3) bf16 logits pass-through, multi-tile dense layout with a partial
    #    (masked) last tile.
    N3, C3, H3, W3 = 2, 4, 64, 72
    logits3 = jax.random.normal(k5, (N3, C3, H3, W3), dtype=jnp.float32)
    logits3 = logits3.astype(jnp.bfloat16)
    labels3 = jax.random.randint(k6, (N3, H3, W3), 0, C3, dtype=jnp.int32)
    loss3 = jax.block_until_ready(
        dice_loss(logits3, labels3, smooth=1.0, vmem_budget_bytes=128 * 1024))
    ref3 = jax.block_until_ready(_dice_loss_ref(logits3, labels3, smooth=1.0))
    assert jnp.allclose(loss3, ref3, atol=2e-5, rtol=1e-5), (loss3, ref3)

    print("KERNEL_OK")
</pallas_src>

<mosaic_0001>
module attributes {stable_mosaic.version = 11 : i64} {
  func.func @_dice_sums_kernel(%arg0: i32, %arg1: i32, %arg2: i32, %arg3: memref<1x4x2x128xf32, #tpu.memory_space<vmem>>, %arg4: memref<1x1x2x128xi32, #tpu.memory_space<vmem>>, %arg5: memref<1x1x4x1xf32, #tpu.memory_space<vmem>>, %arg6: memref<1x1x4x1xf32, #tpu.memory_space<vmem>>, %arg7: memref<4x2x128xf32, #tpu.memory_space<vmem>>, %arg8: memref<4x2x128xf32, #tpu.memory_space<vmem>>) attributes {dimension_semantics = [#tpu.dimension_semantics<parallel>, #tpu.dimension_semantics<parallel>, #tpu.dimension_semantics<arbitrary>], iteration_bounds = array<i64: 2, 1, 1>, scalar_prefetch = 0 : i64, scratch_operands = 2 : i64, tpu.core_type = #tpu.core_type<tc>, window_params = [{transform_indices = @transform_0, window_bounds = array<i64: 1, 4, 2, 128>}, {transform_indices = @transform_1, window_bounds = array<i64: 1, 1, 2, 128>}, {transform_indices = @transform_2, window_bounds = array<i64: 1, 1, 4, 1>}, {transform_indices = @transform_3, window_bounds = array<i64: 1, 1, 4, 1>}]} {
    %c0_i32 = arith.constant 0 : i32
    %0 = arith.cmpi eq, %arg2, %c0_i32 : i32
    %1 = arith.extui %0 : i1 to i32
    %c0_i32_0 = arith.constant 0 : i32
    %2 = arith.cmpi ne, %1, %c0_i32_0 : i32
    scf.if %2 {
      %cst_24 = arith.constant 0.000000e+00 : f32
      %34 = vector.broadcast %cst_24 : f32 to vector<4x2x128xf32>
      %c0_25 = arith.constant 0 : index
      %c0_26 = arith.constant 0 : index
      %c0_27 = arith.constant 0 : index
      %35 = vector.load %arg7[%c0_25, %c0_26, %c0_27] : memref<4x2x128xf32, #tpu.memory_space<vmem>>, vector<4x2x128xf32>
      tpu.vector_store %arg7[%c0_25, %c0_26, %c0_27], %34 {strides = array<i32>} : memref<4x2x128xf32, #tpu.memory_space<vmem>>, vector<4x2x128xf32>,
      %cst_28 = arith.constant 0.000000e+00 : f32
      %36 = vector.broadcast %cst_28 : f32 to vector<4x2x128xf32>
      %c0_29 = arith.constant 0 : index
      %c0_30 = arith.constant 0 : index
      %c0_31 = arith.constant 0 : index
      %37 = vector.load %arg8[%c0_29, %c0_30, %c0_31] : memref<4x2x128xf32, #tpu.memory_space<vmem>>, vector<4x2x128xf32>
      tpu.vector_store %arg8[%c0_29, %c0_30, %c0_31], %36 {strides = array<i32>} : memref<4x2x128xf32, #tpu.memory_space<vmem>>, vector<4x2x128xf32>,
    } else {
    }
    %c0 = arith.constant 0 : index
    %c0_1 = arith.constant 0 : index
    %c0_2 = arith.constant 0 : index
    %c0_3 = arith.constant 0 : index
    %3 = vector.load %arg3[%c0, %c0_1, %c0_2, %c0_3] : memref<1x4x2x128xf32, #tpu.memory_space<vmem>>, vector<1x4x2x128xf32>
    %4 = vector.shape_cast %3 : vector<1x4x2x128xf32> to vector<4x2x128xf32>
    %c0_4 = arith.constant 0 : index
    %c0_5 = arith.constant 0 : index
    %c0_6 = arith.constant 0 : index
    %c0_7 = arith.constant 0 : index
    %5 = vector.load %arg4[%c0_4, %c0_5, %c0_6, %c0_7] : memref<1x1x2x128xi32, #tpu.memory_space<vmem>>, vector<1x1x2x128xi32>
    %6 = vector.shape_cast %5 : vector<1x1x2x128xi32> to vector<1x2x128xi32>
    %cst = arith.constant dense<0xFF800000> : vector<2x128xf32>
    %7 = vector.multi_reduction <maximumf>, %4, %cst [0] : vector<4x2x128xf32> to vector<2x128xf32>
    %8 = vector.shape_cast %7 : vector<2x128xf32> to vector<1x2x128xf32>
    %9 = vector.broadcast %8 : vector<1x2x128xf32> to vector<4x2x128xf32>
    %10 = arith.subf %4, %9 : vector<4x2x128xf32>
    %11 = math.exp %10 : vector<4x2x128xf32>
    %cst_8 = arith.constant dense<0.000000e+00> : vector<2x128xf32>
    %12 = vector.multi_reduction <add>, %11, %cst_8 [0] : vector<4x2x128xf32> to vector<2x128xf32>
    %13 = vector.shape_cast %12 : vector<2x128xf32> to vector<1x2x128xf32>
    %14 = tpu.reciprocal %13 : vector<1x2x128xf32> -> vector<1x2x128xf32>
    %15 = vector.broadcast %14 : vector<1x2x128xf32> to vector<4x2x128xf32>
    %16 = arith.mulf %11, %15 : vector<4x2x128xf32>
    %17 = tpu.iota {dimensions = array<i32: 0>} : vector<4x2x128xi32>
    %18 = vector.broadcast %6 : vector<1x2x128xi32> to vector<4x2x128xi32>
    %19 = arith.cmpi eq, %17, %18 : vector<4x2x128xi32>
    %c0_9 = arith.constant 0 : index
    %c0_10 = arith.constant 0 : index
    %c0_11 = arith.constant 0 : index
    %20 = vector.load %arg7[%c0_9, %c0_10, %c0_11] : memref<4x2x128xf32, #tpu.memory_space<vmem>>, vector<4x2x128xf32>
    %cst_12 = arith.constant 0.000000e+00 : f32
    %21 = vector.broadcast %cst_12 : f32 to vector<4x2x128xf32>
    %22 = arith.select %19, %16, %21 : vector<4x2x128xi1>, vector<4x2x128xf32>
    %23 = arith.addf %20, %22 : vector<4x2x128xf32>
    %c0_13 = arith.constant 0 : index
    %c0_14 = arith.constant 0 : index
    %c0_15 = arith.constant 0 : index
    %24 = vector.load %arg7[%c0_13, %c0_14, %c0_15] : memref<4x2x128xf32, #tpu.memory_space<vmem>>, vector<4x2x128xf32>
    tpu.vector_store %arg7[%c0_13, %c0_14, %c0_15], %23 {strides = array<i32>} : memref<4x2x128xf32, #tpu.memory_space<vmem>>, vector<4x2x128xf32>,
    %c0_16 = arith.constant 0 : index
    %c0_17 = arith.constant 0 : index
    %c0_18 = arith.constant 0 : index
    %25 = vector.load %arg8[%c0_16, %c0_17, %c0_18] : memref<4x2x128xf32, #tpu.memory_space<vmem>>, vector<4x2x128xf32>
    %26 = arith.extui %19 : vector<4x2x128xi1> to vector<4x2x128xi32>
    %27 = arith.sitofp %26 : vector<4x2x128xi32> to vector<4x2x128xf32>
    %28 = arith.addf %16, %27 : vector<4x2x128xf32>
    %29 = arith.addf %25, %28 : vector<4x2x128xf32>
    %c0_19 = arith.constant 0 : index
    %c0_20 = arith.constant 0 : index
    %c0_21 = arith.constant 0 : index
    %30 = vector.load %arg8[%c0_19, %c0_20, %c0_21] : memref<4x2x128xf32, #tpu.memory_space<vmem>>, vector<4x2x128xf32>
    tpu.vector_store %arg8[%c0_19, %c0_20, %c0_21], %29 {strides = array<i32>} : memref<4x2x128xf32, #tpu.memory_space<vmem>>, vector<4x2x128xf32>,
    %c0_i32_22 = arith.constant 0 : i32
    %31 = arith.cmpi eq, %arg2, %c0_i32_22 : i32
    %32 = arith.extui %31 : i1 to i32
    %c0_i32_23 = arith.constant 0 : i32
    %33 = arith.cmpi ne, %32, %c0_i32_23 : i32
    scf.if %33 {
      %c0_24 = arith.constant 0 : index
      %c0_25 = arith.constant 0 : index
      %c0_26 = arith.constant 0 : index
      %34 = vector.load %arg7[%c0_24, %c0_25, %c0_26] : memref<4x2x128xf32, #tpu.memory_space<vmem>>, vector<4x2x128xf32>
      %c0_27 = arith.constant 0 : index
      %c0_28 = arith.constant 0 : index
      %c0_29 = arith.constant 0 : index
      %35 = vector.load %arg8[%c0_27, %c0_28, %c0_29] : memref<4x2x128xf32, #tpu.memory_space<vmem>>, vector<4x2x128xf32>
      %cst_30 = arith.constant dense<0.000000e+00> : vector<4x2xf32>
      %36 = vector.multi_reduction <add>, %34, %cst_30 [2] : vector<4x2x128xf32> to vector<4x2xf32>
      %cst_31 = arith.constant dense<0.000000e+00> : vector<4x2xf32>
      %37 = vector.multi_reduction <add>, %35, %cst_31 [2] : vector<4x2x128xf32> to vector<4x2xf32>
      %cst_32 = arith.constant dense<0.000000e+00> : vector<4xf32>
      %38 = vector.multi_reduction <add>, %36, %cst_32 [1] : vector<4x2xf32> to vector<4xf32>
      %39 = vector.shape_cast %38 : vector<4xf32> to vector<4x1xf32>
      %c0_33 = arith.constant 0 : index
      %c0_34 = arith.constant 0 : index
      %c0_35 = arith.constant 0 : index
      %c0_36 = arith.constant 0 : index
      %40 = vector.load %arg5[%c0_33, %c0_34, %c0_35, %c0_36] : memref<1x1x4x1xf32, #tpu.memory_space<vmem>>, vector<1x1x4x1xf32>
      %41 = vector.shape_cast %40 : vector<1x1x4x1xf32> to vector<4x1xf32>
      %42 = vector.shape_cast %39 : vector<4x1xf32> to vector<1x1x4x1xf32>
      tpu.vector_store %arg5[%c0_33, %c0_34, %c0_35, %c0_36], %42 {strides = array<i32>} : memref<1x1x4x1xf32, #tpu.memory_space<vmem>>, vector<1x1x4x1xf32>,
      %cst_37 = arith.constant dense<0.000000e+00> : vector<4xf32>
      %43 = vector.multi_reduction <add>, %37, %cst_37 [1] : vector<4x2xf32> to vector<4xf32>
      %44 = vector.shape_cast %43 : vector<4xf32> to vector<4x1xf32>
      %c0_38 = arith.constant 0 : index
      %c0_39 = arith.constant 0 : index
      %c0_40 = arith.constant 0 : index
      %c0_41 = arith.constant 0 : index
      %45 = vector.load %arg6[%c0_38, %c0_39, %c0_40, %c0_41] : memref<1x1x4x1xf32, #tpu.memory_space<vmem>>, vector<1x1x4x1xf32>
      %46 = vector.shape_cast %45 : vector<1x1x4x1xf32> to vector<4x1xf32>
      %47 = vector.shape_cast %44 : vector<4x1xf32> to vector<1x1x4x1xf32>
      tpu.vector_store %arg6[%c0_38, %c0_39, %c0_40, %c0_41], %47 {strides = array<i32>} : memref<1x1x4x1xf32, #tpu.memory_space<vmem>>, vector<1x1x4x1xf32>,
    } else {
    }
    return
  }
  func.func @transform_0(%arg0: i32, %arg1: i32, %arg2: i32) -> (i32, i32, i32, i32) {
    %c1_i32 = arith.constant 1 : i32
    %0 = arith.muli %arg1, %c1_i32 : i32
    %1 = arith.addi %0, %arg2 : i32
    %c0_i32 = arith.constant 0 : i32
    %c0_i32_0 = arith.constant 0 : i32
    %c0_i32_1 = arith.constant 0 : i32
    return %arg0, %c0_i32, %1, %c0_i32_0 : i32, i32, i32, i32
  }
  func.func @transform_1(%arg0: i32, %arg1: i32, %arg2: i32) -> (i32, i32, i32, i32) {
    %c1_i32 = arith.constant 1 : i32
    %0 = arith.muli %arg1, %c1_i32 : i32
    %1 = arith.addi %0, %arg2 : i32
    %c0_i32 = arith.constant 0 : i32
    %c0_i32_0 = arith.constant 0 : i32
    %c0_i32_1 = arith.constant 0 : i32
    return %arg0, %c0_i32, %1, %c0_i32_0 : i32, i32, i32, i32
  }
  func.func @transform_2(%arg0: i32, %arg1: i32, %arg2: i32) -> (i32, i32, i32, i32) {
    %c0_i32 = arith.constant 0 : i32
    %c0_i32_0 = arith.constant 0 : i32
    %c0_i32_1 = arith.constant 0 : i32
    return %arg0, %arg1, %c0_i32, %c0_i32_0 : i32, i32, i32, i32
  }
  func.func @transform_3(%arg0: i32, %arg1: i32, %arg2: i32) -> (i32, i32, i32, i32) {
    %c0_i32 = arith.constant 0 : i32
    %c0_i32_0 = arith.constant 0 : i32
    %c0_i32_1 = arith.constant 0 : i32
    return %arg0, %arg1, %c0_i32, %c0_i32_0 : i32, i32, i32, i32
  }
}

</mosaic_0001>

<llo_original>
// kernel: tpu_custom_call.1
$region0: #{tpu_custom_call.1}
  #allocation0 [shape = 'u32[]', space=smem, size = 0x4, offset = 0x4, fixed_abs, tag = 'smem constant byte address 0x4 - core index']
  #allocation1 [shape = 'u32[144,128]{1,0:T(1,128)}', space=vmem, size = 0x12000, scoped, tag = 'internal scratch']
  #allocation2 [shape = 'f32[4,2,128]{2,1,0:T(2,128)}', space=vmem, size = 0x1000, scoped, tag = 'scratch operand']
  #allocation3 [shape = 'f32[4,2,128]{2,1,0:T(2,128)}', space=vmem, size = 0x1000, scoped, tag = 'scratch operand']
  %s0 = inlined_call_operand.hbm [shape: f32[2,4,2,128], index: 0, kind: input, shape index: {}]
  %s1 = inlined_call_operand.hbm [shape: s32[2,1,2,128], index: 1, kind: input, shape index: {}]
  %s2 = inlined_call_operand.vmem [shape: f32[2,1,4,1], index: 2, kind: output, shape index: {0}]
  %s3 = inlined_call_operand.vmem [shape: f32[2,1,4,1], index: 3, kind: output, shape index: {1}]
  %4 = xla_tuple %s2, %s3
  %s5 = sld [smem:[#allocation0]]
  $region65: #{tpu_custom_call.1} parent=0
    _
  %s7 = ssub.s32 1, %s5
  %s8 = scalar_select 0, %s7, %s5
  $region1: #{tpu_custom_call.1} parent=0
    #allocation4 [shape = 'u8[8192]{0}', space=vmem, size = 0x2000, scoped, tag = 'input window, operand 0']
    #allocation5 [shape = 's32[2]{0}', space=sflag, size = 0x8, scoped, tag = 'scoped memory for tpu_custom_call.1']
    #allocation6 [shape = 'u8[2048]{0}', space=vmem, size = 0x800, scoped, tag = 'input window, operand 1']
    #allocation7 [shape = 's32[2]{0}', space=sflag, size = 0x8, scoped, tag = 'scoped memory for tpu_custom_call.1']
    %9 = vsyncpa [#allocation5], 0
    %s10 = scalar_lea.sflag [#allocation5], 1
    %11 = vsyncpa %s10, 0
    %12 = vsyncpa [#allocation7], 0
    %s13 = scalar_lea.sflag [#allocation7], 1
    %14 = vsyncpa %s13, 0
    loop: start=0, step=1, limit=4
    $region2: #{tpu_custom_call.1} parent=1 // loop_pre_header
      _
    $region3: #{tpu_custom_call.1} parent=1 // loop_header
      %s16 = sphi 0, %s20
      %p17 = scmp.ge.s32.totalorder %s16, 4
      %s23 = sphi 0, %s42
      %s24 = sphi 0, %s38
      %s25 = sphi 0, %s34
      %s26 = sphi 0, %s23
      %s27 = sphi 0, %s24
      %s28 = sphi 0, %s25
      %s29 = sphi 0, %s26
      %s30 = sphi 0, %s27
      %s31 = sphi 0, %s28
      %s49 = sphi 0, %s51
      %s52 = sphi 0, %s49
      %s53 = sphi 0, %s52
      %s69 = sphi 0, %s53
      %s79 = sphi 0, %s81
      %s82 = sphi 0, %s79
      %s83 = sphi 0, %s82
      %s99 = sphi 0, %s83
      %s107 = sphi 0, %s109
      %s110 = sphi 0, %s107
      %s111 = sphi 0, %s110
      %s127 = sphi 0, %s111
      %s135 = sphi 0, %s137
      %s138 = sphi 0, %s135
      %s139 = sphi 0, %s138
      %s155 = sphi 0, %s139
    $region4: #{tpu_custom_call.1} parent=1 // loop_header_branch
      %19 = sbr.rel (%p17) target = $region8
    $region5: #{tpu_custom_call.1} parent=1 // loop_body
      %s21 = ssub.s32 %s16, 1
      %s22 = ssub.s32 %s16, 2
      %s32 = sadd.s32 1, %s25
      %p33 = scmp.ge.s32.totalorder %s32, 1
      %s34 = scalar_select %p33, 0, %s32
      %s35 = sadd.s32 1, %s24
      %s36 = scalar_select %p33, %s35, %s24
      %p37 = scmp.ge.s32.totalorder %s36, 1
      %s38 = scalar_select %p37, 0, %s36
      %s39 = sadd.s32 1, %s23
      %s40 = scalar_select %p37, %s39, %s23
      %p41 = scmp.ge.s32.totalorder %s40, 2
      %s42 = scalar_select %p41, 0, %s40
      %s43 = sadd.s32 %s24, %s25
      %s44 = sadd.s32 %s38, %s34
      %s45 = ssub.s32 %s23, %s42
      %s46 = ssub.s32 %s43, %s44
      %s47 = sor.u32 %s45, %s46
      %p48 = scmp.eq.s32.totalorder %s47, 0
      %s50 = sadd.s32 %s49, 1
      %s51 = scalar_select %p48, %s49, %s50
      %p54 = pneg %p48
      %p55 = scmp.eq.s32.totalorder %s16, 1
      %p56 = por %p54, %p55
      %p57 = scmp.ne.s32.totalorder %s49, %s52
      %p58 = scmp.eq.s32.totalorder %s16, 0
      %p59 = por %p57, %p58
      %p60 = scmp.ne.s32.totalorder %s49, %s52
      %p61 = scmp.eq.s32.totalorder %s21, 1
      %p62 = por %p60, %p61
      %p63 = scmp.ne.s32.totalorder %s52, %s53
      %p64 = scmp.eq.s32.totalorder %s21, 0
      %p65 = por %p63, %p64
      %p66 = scmp.ne.s32.totalorder %s52, %s53
      %p67 = scmp.eq.s32.totalorder %s22, 1
      %p68 = por %p66, %p67
      %p70 = scmp.ne.s32.totalorder %s53, %s69
      %p71 = scmp.eq.s32.totalorder %s22, 0
      %p72 = por %p70, %p71
      %s73 = sadd.s32 %s24, %s25
      %s74 = sadd.s32 %s38, %s34
      %s75 = ssub.s32 %s23, %s42
      %s76 = ssub.s32 %s73, %s74
      %s77 = sor.u32 %s75, %s76
      %p78 = scmp.eq.s32.totalorder %s77, 0
      %s80 = sadd.s32 %s79, 1
      %s81 = scalar_select %p78, %s79, %s80
      %p84 = pneg %p78
      %p85 = scmp.eq.s32.totalorder %s16, 1
      %p86 = por %p84, %p85
      %p87 = scmp.ne.s32.totalorder %s79, %s82
      %p88 = scmp.eq.s32.totalorder %s16, 0
      %p89 = por %p87, %p88
      %p90 = scmp.ne.s32.totalorder %s79, %s82
      %p91 = scmp.eq.s32.totalorder %s21, 1
      %p92 = por %p90, %p91
      %p93 = scmp.ne.s32.totalorder %s82, %s83
      %p94 = scmp.eq.s32.totalorder %s21, 0
      %p95 = por %p93, %p94
      %p96 = scmp.ne.s32.totalorder %s82, %s83
      %p97 = scmp.eq.s32.totalorder %s22, 1
      %p98 = por %p96, %p97
      %p100 = scmp.ne.s32.totalorder %s83, %s99
      %p101 = scmp.eq.s32.totalorder %s22, 0
      %p102 = por %p100, %p101
      %s103 = ssub.s32 %s23, %s42
      %s104 = ssub.s32 %s24, %s38
      %s105 = sor.u32 %s103, %s104
      %p106 = scmp.eq.s32.totalorder %s105, 0
      %s108 = sadd.s32 %s107, 1
      %s109 = scalar_select %p106, %s107, %s108
      %p112 = pneg %p106
      %p113 = scmp.eq.s32.totalorder %s16, 1
      %p114 = por %p112, %p113
      %p115 = scmp.ne.s32.totalorder %s107, %s110
      %p116 = scmp.eq.s32.totalorder %s16, 0
      %p117 = por %p115, %p116
      %p118 = scmp.ne.s32.totalorder %s107, %s110
      %p119 = scmp.eq.s32.totalorder %s21, 1
      %p120 = por %p118, %p119
      %p121 = scmp.ne.s32.totalorder %s110, %s111
      %p122 = scmp.eq.s32.totalorder %s21, 0
      %p123 = por %p121, %p122
      %p124 = scmp.ne.s32.totalorder %s110, %s111
      %p125 = scmp.eq.s32.totalorder %s22, 1
      %p126 = por %p124, %p125
      %p128 = scmp.ne.s32.totalorder %s111, %s127
      %p129 = scmp.eq.s32.totalorder %s22, 0
      %p130 = por %p128, %p129
      %s131 = ssub.s32 %s23, %s42
      %s132 = ssub.s32 %s24, %s38
      %s133 = sor.u32 %s131, %s132
      %p134 = scmp.eq.s32.totalorder %s133, 0
      %s136 = sadd.s32 %s135, 1
      %s137 = scalar_select %p134, %s135, %s136
      %p140 = pneg %p134
      %p141 = scmp.eq.s32.totalorder %s16, 1
      %p142 = por %p140, %p141
      %p143 = scmp.ne.s32.totalorder %s135, %s138
      %p144 = scmp.eq.s32.totalorder %s16, 0
      %p145 = por %p143, %p144
      %p146 = scmp.ne.s32.totalorder %s135, %s138
      %p147 = scmp.eq.s32.totalorder %s21, 1
      %p148 = por %p146, %p147
      %p149 = scmp.ne.s32.totalorder %s138, %s139
      %p150 = scmp.eq.s32.totalorder %s21, 0
      %p151 = por %p149, %p150
      %p152 = scmp.ne.s32.totalorder %s138, %s139
      %p153 = scmp.eq.s32.totalorder %s22, 1
      %p154 = por %p152, %p153
      %p156 = scmp.ne.s32.totalorder %s139, %s155
      %p157 = scmp.eq.s32.totalorder %s22, 0
      %p158 = por %p156, %p157
      %p159 = scmp.le.s32.totalorder 1, %s16
      %p160 = scmp.lt.s32.totalorder %s16, 3
      %p161 = pnand %p159, %p160
      %p162 = pneg %p161
      // Predicated region
      $region9: #{tpu_custom_call.1} parent=5 // pred_check
        _
      $region10: #{tpu_custom_call.1} parent=5 // pred_check_branch
        %164 = sbr.rel (%p161) target = $region12
      $region11: #{tpu_custom_call.1} parent=5 // pred_region
        %s165 = ssub.s32 %s16, 1
      $region12: #{tpu_custom_call.1} parent=5 // pred_fallthru
        _
      %p166 = scmp.lt.s32.totalorder %s16, 2
      // Predicated region
      $region13: #{tpu_custom_call.1} parent=5 // pred_check
        %p167 = pneg %p166
      $region14: #{tpu_custom_call.1} parent=5 // pred_check_branch
        %169 = sbr.rel (%p167) target = $region16
      $region15: #{tpu_custom_call.1} parent=5 // pred_region
        // Predicated region
        $region17: #{tpu_custom_call.1} parent=15 // pred_check
          %p170 = pneg %p59
        $region18: #{tpu_custom_call.1} parent=15 // pred_check_branch
          %172 = sbr.rel (%p170) target = $region20
        $region19: #{tpu_custom_call.1} parent=15 // pred_region
          %s173 = sand.u32 %s49, 1
          %s174 = scalar_lea.sflag [#allocation5], %s173
          %s175 = sand.u32 %s49, 1
          %s176 = smul.addr %s175, 8
          %s177 = scalar_lea.vmem [#allocation4], %s176
          %s178 = sadd.s32 %s24, %s25
          %s180 = ssub.s32 128, 128
          %181 = vsyncadd %s174, %s180
          %s182 = smul.addr %s23, 4
          %s183 = sadd.s32 %s178, %s182
          %s184 = smul.addr %s183, 32
          %s185 = scalar_lea.hbm %s0, %s184
          %s186 = sshll.u32 %s177, 4
          %s187 = int_to_ptr.vmem [resolvable:$true] %s186
          %192 = dma.hbm_to_vmem [thread:$0]  %s185, 128, %s187, %s174, 32, 32, 2
        $region20: #{tpu_custom_call.1} parent=15 // pred_fallthru
          _
        // Predicated region
        $region21: #{tpu_custom_call.1} parent=15 // pred_check
          %p193 = pneg %p89
        $region22: #{tpu_custom_call.1} parent=15 // pred_check_branch
          %195 = sbr.rel (%p193) target = $region24
        $region23: #{tpu_custom_call.1} parent=15 // pred_region
          %s196 = sand.u32 %s79, 1
          %s197 = scalar_lea.sflag [#allocation7], %s196
          %s198 = sand.u32 %s79, 1
          %s199 = smul.addr %s198, 2
          %s200 = scalar_lea.vmem [#allocation6], %s199
          %s201 = sadd.s32 %s24, %s25
          %s203 = ssub.s32 32, 32
          %204 = vsyncadd %s197, %s203
          %s205 = sadd.s32 %s201, %s23
          %s206 = smul.addr %s205, 32
          %s207 = scalar_lea.hbm %s1, %s206
          %s209 = sshll.u32 %s200, 4
          %s210 = int_to_ptr.vmem [resolvable:$true] %s209
          %212 = dma.hbm_to_vmem [thread:$0]  %s207, 32, %s210, %s197
        $region24: #{tpu_custom_call.1} parent=15 // pred_fallthru
          _
      $region16: #{tpu_custom_call.1} parent=5 // pred_fallthru
        _
      %p213 = scmp.le.s32.totalorder 1, %s16
      %p214 = scmp.lt.s32.totalorder %s16, 3
      %p215 = pnand %p213, %p214
      %p216 = pneg %p215
      // Predicated region
      $region25: #{tpu_custom_call.1} parent=5 // pred_check
        _
      $region26: #{tpu_custom_call.1} parent=5 // pred_check_branch
        %218 = sbr.rel (%p215) target = $region28
      $region27: #{tpu_custom_call.1} parent=5 // pred_region
        %s219 = ssub.s32 %s16, 1
        %s220 = sand.u32 %s52, 1
        %s221 = scalar_lea.sflag [#allocation5], %s220
        %s222 = sand.u32 %s52, 1
        %s223 = smul.addr %s222, 8
        %s224 = scalar_lea.vmem [#allocation4], %s223
        // Predicated region
        $region29: #{tpu_custom_call.1} parent=27 // pred_check
          %p225 = pneg %p65
        $region30: #{tpu_custom_call.1} parent=27 // pred_check_branch
          %227 = sbr.rel (%p225) target = $region32
        $region31: #{tpu_custom_call.1} parent=27 // pred_region
          %228 = dma.done %s221, 128
        $region32: #{tpu_custom_call.1} parent=27 // pred_fallthru
          _
        %s229 = sand.u32 %s82, 1
        %s230 = scalar_lea.sflag [#allocation7], %s229
        %s231 = sand.u32 %s82, 1
        %s232 = smul.addr %s231, 2
        %s233 = scalar_lea.vmem [#allocation6], %s232
        // Predicated region
        $region33: #{tpu_custom_call.1} parent=27 // pred_check
          %p234 = pneg %p95
        $region34: #{tpu_custom_call.1} parent=27 // pred_check_branch
          %236 = sbr.rel (%p234) target = $region36
        $region35: #{tpu_custom_call.1} parent=27 // pred_region
          %237 = dma.done %s230, 32
        $region36: #{tpu_custom_call.1} parent=27 // pred_fallthru
          _
        %s238 = sand.u32 %s52, 1
        %s239 = scalar_lea.sflag [#allocation5], %s238
        %s240 = sand.u32 %s52, 1
        %s241 = smul.addr %s240, 8
        %s242 = scalar_lea.vmem [#allocation4], %s241
        %p243 = pneg %p65
        %p244 = pneg %p62
        %s245 = sand.u32 %s82, 1
        %s246 = scalar_lea.sflag [#allocation7], %s245
        %s247 = sand.u32 %s82, 1
        %s248 = smul.addr %s247, 2
        %s249 = scalar_lea.vmem [#allocation6], %s248
        %p250 = pneg %p95
        %p251 = pneg %p92
        %p252 = pneg %p123
        %p253 = pneg %p120
        %p254 = scmp.lt.s32.totalorder %s26, 1
        %s255 = scalar_select %p254, %s26, 1
        %p256 = scmp.lt.s32.totalorder %s27, 0
        %s257 = scalar_select %p256, %s27, 0
        %s258 = sadd.s32 %s257, %s255
        %s259 = smul.addr %s258, 4
        %s260 = scalar_lea.vmem %s2, %s259
        %p261 = pneg %p151
        %p262 = pneg %p148
        %p263 = scmp.lt.s32.totalorder %s26, 1
        %s264 = scalar_select %p263, %s26, 1
        %p265 = scmp.lt.s32.totalorder %s27, 0
        %s266 = scalar_select %p265, %s27, 0
        %s267 = sadd.s32 %s266, %s264
        %s268 = smul.addr %s267, 4
        %s269 = scalar_lea.vmem %s3, %s268
        %s270 = sadd.s32 %s27, %s28
        %s271 = sadd.s32 %s27, %s28
        %p272 = scmp.lt.s32.totalorder %s26, 1
        %s273 = scalar_select %p272, %s26, 1
        %p274 = scmp.lt.s32.totalorder %s27, 0
        %s275 = scalar_select %p274, %s27, 0
        %s276 = sadd.s32 %s275, %s273
        %s277 = smul.addr %s276, 4
        %s278 = scalar_lea.vmem %s2, %s277
        %p279 = scmp.lt.s32.totalorder %s26, 1
        %s280 = scalar_select %p279, %s26, 1
        %p281 = scmp.lt.s32.totalorder %s27, 0
        %s282 = scalar_select %p281, %s27, 0
        %s283 = sadd.s32 %s282, %s280
        %s284 = smul.addr %s283, 4
        %s285 = scalar_lea.vmem %s3, %s284
        %p286 = scmp.eq.s32.totalorder %s28, 0
        // Predicated region
        $region37: #{tpu_custom_call.1} parent=27 // pred_check
          %p287 = pneg %p286
        $region38: #{tpu_custom_call.1} parent=27 // pred_check_branch
          %289 = sbr.rel (%p287) target = $region40
        $region39: #{tpu_custom_call.1} parent=27 // pred_region
          %290 = vst [vmem:[#allocation2] sm:$0x3] 0.0
          %291 = vst [vmem:[#allocation2 + $0x2] sm:$0x3] 0.0
          %292 = vst [vmem:[#allocation2 + $0x4] sm:$0x3] 0.0
          %293 = vst [vmem:[#allocation2 + $0x6] sm:$0x3] 0.0
          %294 = vst [vmem:[#allocation3] sm:$0x3] 0.0
          %295 = vst [vmem:[#allocation3 + $0x2] sm:$0x3] 0.0
          %296 = vst [vmem:[#allocation3 + $0x4] sm:$0x3] 0.0
          %297 = vst [vmem:[#allocation3 + $0x6] sm:$0x3] 0.0
        $region40: #{tpu_custom_call.1} parent=27 // pred_fallthru
          _
        %v298 = vld [vmem:[%s224] sm:$0x3]
        %v299 = vld [vmem:[%s224 + $0x2] sm:$0x3]
        %v300 = vld [vmem:[%s224 + $0x4] sm:$0x3]
        %v301 = vld [vmem:[%s224 + $0x6] sm:$0x3]
        %v302 = vld [vmem:[%s233] sm:$0x3]
        %vm303 = vcmask 1041408
        %v304 = vsel %vm303, %v298, -inf
        %v305 = vsel %vm303, %v299, -inf
        %v306 = vsel %vm303, %v300, -inf
        %v307 = vsel %vm303, %v301, -inf
        %v308 = vmax.f32 %v304, %v305
        %v309 = vmax.f32 %v306, %v307
        %v310 = vmax.f32 %v308, %v309
        %v311 = vsub.f32 %v298, %v310
        %v312 = vsub.f32 %v299, %v310
        %v313 = vsub.f32 %v300, %v310
        %v314 = vsub.f32 %v301, %v310
        %v315 = vmul.f32 %v311, 1.442695
        %v316 = vpow.pop %v315
        %v317 = vmul.f32 %v312, 1.442695
        %v318 = vpow.pop %v317
        %v319 = vmul.f32 %v313, 1.442695
        %v320 = vpow.pop %v319
        %v321 = vmul.f32 %v314, 1.442695
        %v322 = vpow.pop %v321
        %v323 = vsel %vm303, %v316, 0.0
        %v324 = vsel %vm303, %v318, 0.0
        %v325 = vadd.f32 %v323, %v324
        %v326 = vsel %vm303, %v320, 0.0
        %v327 = vadd.f32 %v325, %v326
        %v328 = vsel %vm303, %v322, 0.0
        %v329 = vadd.f32 %v327, %v328
        %v330 = vrcp.pop %v329
        %v331 = vmul.f32 %v316, %v330
        %v332 = vmul.f32 %v318, %v330
        %v333 = vmul.f32 %v320, %v330
        %v334 = vmul.f32 %v322, %v330
        %vm335 = vcmp.eq.s32.totalorder %v302, 0
        %vm336 = vcmp.eq.s32.totalorder %v302, 1
        %vm337 = vcmp.eq.s32.totalorder %v302, 2
        %vm338 = vcmp.eq.s32.totalorder %v302, 3
        %v339 = vld [vmem:[#allocation2] sm:$0x3]
        %v340 = vld [vmem:[#allocation2 + $0x2] sm:$0x3]
        %v341 = vld [vmem:[#allocation2 + $0x4] sm:$0x3]
        %v342 = vld [vmem:[#allocation2 + $0x6] sm:$0x3]
        %v343 = vsel %vm335, %v331, 0.0
        %v344 = vsel %vm336, %v332, 0.0
        %v345 = vsel %vm337, %v333, 0.0
        %v346 = vsel %vm338, %v334, 0.0
        %v347 = vadd.f32 %v339, %v343
        %v348 = vadd.f32 %v340, %v344
        %v349 = vadd.f32 %v341, %v345
        %v350 = vadd.f32 %v342, %v346
        %351 = vst [vmem:[#allocation2] sm:$0x3] %v347
        %352 = vst [vmem:[#allocation2 + $0x2] sm:$0x3] %v348
        %353 = vst [vmem:[#allocation2 + $0x4] sm:$0x3] %v349
        %354 = vst [vmem:[#allocation2 + $0x6] sm:$0x3] %v350
        %v355 = vld [vmem:[#allocation3] sm:$0x3]
        %v356 = vld [vmem:[#allocation3 + $0x2] sm:$0x3]
        %v357 = vld [vmem:[#allocation3 + $0x4] sm:$0x3]
        %v358 = vld [vmem:[#allocation3 + $0x6] sm:$0x3]
        %v359 = vsel %vm335, 1, 0
        %v360 = vsel %vm336, 1, 0
        %v361 = vsel %vm337, 1, 0
        %v362 = vsel %vm338, 1, 0
        %v363 = vcvt.s32.f32 %v359
        %v364 = vcvt.s32.f32 %v360
        %v365 = vcvt.s32.f32 %v361
        %v366 = vcvt.s32.f32 %v362
        %v367 = vadd.f32 %v331, %v363
        %v368 = vadd.f32 %v332, %v364
        %v369 = vadd.f32 %v333, %v365
        %v370 = vadd.f32 %v334, %v366
        %v371 = vadd.f32 %v355, %v367
        %v372 = vadd.f32 %v356, %v368
        %v373 = vadd.f32 %v357, %v369
        %v374 = vadd.f32 %v358, %v370
        %375 = vst [vmem:[#allocation3] sm:$0x3] %v371
        %376 = vst [vmem:[#allocation3 + $0x2] sm:$0x3] %v372
        %377 = vst [vmem:[#allocation3 + $0x4] sm:$0x3] %v373
        %378 = vst [vmem:[#allocation3 + $0x6] sm:$0x3] %v374
        // Predicated region
        $region41: #{tpu_custom_call.1} parent=27 // pred_check
          %p379 = pneg %p286
        $region42: #{tpu_custom_call.1} parent=27 // pred_check_branch
          %381 = sbr.rel (%p379) target = $region44
        $region43: #{tpu_custom_call.1} parent=27 // pred_region
          %v382 = vld [vmem:[#allocation2] sm:$0x3]
          %v383 = vld [vmem:[#allocation2 + $0x2] sm:$0x3]
          %v384 = vld [vmem:[#allocation2 + $0x4] sm:$0x3]
          %v385 = vld [vmem:[#allocation2 + $0x6] sm:$0x3]
          %v386 = vld [vmem:[#allocation3] sm:$0x3]
          %v387 = vld [vmem:[#allocation3 + $0x2] sm:$0x3]
          %v388 = vld [vmem:[#allocation3 + $0x4] sm:$0x3]
          %v389 = vld [vmem:[#allocation3 + $0x6] sm:$0x3]
          %v390 = vsel %vm303, %v382, 0.0
          %391 = vadd.xlane.f32.xlu0 %v390
          %v392 = vpop.xlane.xlu0 %391
          %v393 = vsel %vm303, %v383, 0.0
          %394 = vadd.xlane.f32.xlu0 %v393
          %v395 = vpop.xlane.xlu0 %394
          %v396 = vsel %vm303, %v384, 0.0
          %397 = vadd.xlane.f32.xlu0 %v396
          %v398 = vpop.xlane.xlu0 %397
          %v399 = vsel %vm303, %v385, 0.0
          %400 = vadd.xlane.f32.xlu0 %v399
          %v401 = vpop.xlane.xlu0 %400
          %v402 = vsel %vm303, %v386, 0.0
          %403 = vadd.xlane.f32.xlu0 %v402
          %v404 = vpop.xlane.xlu0 %403
          %v405 = vsel %vm303, %v387, 0.0
          %406 = vadd.xlane.f32.xlu0 %v405
          %v407 = vpop.xlane.xlu0 %406
          %v408 = vsel %vm303, %v388, 0.0
          %409 = vadd.xlane.f32.xlu0 %v408
          %v410 = vpop.xlane.xlu0 %409
          %v411 = vsel %vm303, %v389, 0.0
          %412 = vadd.xlane.f32.xlu0 %v411
          %v413 = vpop.xlane.xlu0 %412
          %v418 = vlaneseq
          %v419 = vand.u32 %v418, 127
          %v420 = vlaneseq
          %v421 = vshrl.u32 %v420, 7
          %v422 = vsub.s32 %v419, %v421
          %v423 = vrot.slane %v392, %v422
          %v424 = vlaneseq
          %v425 = vshrl.u32 %v424, 7
          %v426 = vsub.s32 %v419, %v425
          %v427 = vrot.slane %v395, %v426
          %v428 = vlaneseq
          %v429 = vshrl.u32 %v428, 7
          %v430 = vsub.s32 %v419, %v429
          %v431 = vrot.slane %v398, %v430
          %v432 = vlaneseq
          %v433 = vshrl.u32 %v432, 7
          %v434 = vsub.s32 %v419, %v433
          %v435 = vrot.slane %v401, %v434
          %vm436 = vcmask 1041409
          %v437 = vsel %vm436, %v427, %v423
          %vm438 = vcmask 1042434
          %v439 = vsel %vm438, %v431, %v437
          %vm440 = vcmask 1043459
          %v441 = vsel %vm440, %v435, %v439
          %vm443 = vcmask 11264
          %v444 = vsel %vm443, %v441, 0.0
          %445 = vadd.xlane.f32.xlu0 %v444
          %v446 = vpop.xlane.xlu0 %445
          %vm447 = vcmask 3072
          %448 = vst.msk [vmem:[%s278] sm:$0xf] %vm447, %v446
          %v453 = vlaneseq
          %v454 = vshrl.u32 %v453, 7
          %v455 = vsub.s32 %v419, %v454
          %v456 = vrot.slane %v404, %v455
          %v457 = vlaneseq
          %v458 = vshrl.u32 %v457, 7
          %v459 = vsub.s32 %v419, %v458
          %v460 = vrot.slane %v407, %v459
          %v461 = vlaneseq
          %v462 = vshrl.u32 %v461, 7
          %v463 = vsub.s32 %v419, %v462
          %v464 = vrot.slane %v410, %v463
          %v465 = vlaneseq
          %v466 = vshrl.u32 %v465, 7
          %v467 = vsub.s32 %v419, %v466
          %v468 = vrot.slane %v413, %v467
          %v469 = vsel %vm436, %v460, %v456
          %v470 = vsel %vm438, %v464, %v469
          %v471 = vsel %vm440, %v468, %v470
          %v473 = vsel %vm443, %v471, 0.0
          %474 = vadd.xlane.f32.xlu0 %v473
          %v475 = vpop.xlane.xlu0 %474
          %476 = vst.msk [vmem:[%s285] sm:$0xf] %vm447, %v475
        $region44: #{tpu_custom_call.1} parent=27 // pred_fallthru
          _
        %p477 = scmp.lt.s32.totalorder %s26, 1
        %s478 = scalar_select %p477, %s26, 1
        %p479 = scmp.lt.s32.totalorder %s27, 0
        %s480 = scalar_select %p479, %s27, 0
        %s481 = sadd.s32 %s480, %s478
        %s482 = smul.addr %s481, 4
        %s483 = scalar_lea.vmem %s2, %s482
        %p484 = scmp.lt.s32.totalorder %s26, 1
        %s485 = scalar_select %p484, %s26, 1
        %p486 = scmp.lt.s32.totalorder %s27, 0
        %s487 = scalar_select %p486, %s27, 0
        %s488 = sadd.s32 %s487, %s485
        %s489 = smul.addr %s488, 4
        %s490 = scalar_lea.vmem %s3, %s489
        // Predicated region
        $region45: #{tpu_custom_call.1} parent=27 // pred_check
          %p491 = pneg %p120
        $region46: #{tpu_custom_call.1} parent=27 // pred_check_branch
          %493 = sbr.rel (%p491) target = $region48
        $region47: #{tpu_custom_call.1} parent=27 // pred_region
          _
        $region48: #{tpu_custom_call.1} parent=27 // pred_fallthru
          _
        // Predicated region
        $region49: #{tpu_custom_call.1} parent=27 // pred_check
          %p494 = pneg %p148
        $region50: #{tpu_custom_call.1} parent=27 // pred_check_branch
          %496 = sbr.rel (%p494) target = $region52
        $region51: #{tpu_custom_call.1} parent=27 // pred_region
          _
        $region52: #{tpu_custom_call.1} parent=27 // pred_fallthru
          _
      $region28: #{tpu_custom_call.1} parent=5 // pred_fallthru
        _
      %p497 = scmp.le.s32.totalorder 2, %s16
      // Predicated region
      $region53: #{tpu_custom_call.1} parent=5 // pred_check
        %p498 = pneg %p497
      $region54: #{tpu_custom_call.1} parent=5 // pred_check_branch
        %500 = sbr.rel (%p498) target = $region56
      $region55: #{tpu_custom_call.1} parent=5 // pred_region
        %s501 = ssub.s32 %s16, 2
        // Predicated region
        $region57: #{tpu_custom_call.1} parent=55 // pred_check
          %p502 = pneg %p126
        $region58: #{tpu_custom_call.1} parent=55 // pred_check_branch
          %504 = sbr.rel (%p502) target = $region60
        $region59: #{tpu_custom_call.1} parent=55 // pred_region
          %p505 = scmp.lt.s32.totalorder %s29, 1
          %s506 = scalar_select %p505, %s29, 1
          %p507 = scmp.lt.s32.totalorder %s30, 0
          %s508 = scalar_select %p507, %s30, 0
          %s509 = sadd.s32 %s508, %s506
          %s510 = smul.addr %s509, 4
          %s511 = scalar_lea.vmem %s2, %s510
        $region60: #{tpu_custom_call.1} parent=55 // pred_fallthru
          _
        // Predicated region
        $region61: #{tpu_custom_call.1} parent=55 // pred_check
          %p512 = pneg %p154
        $region62: #{tpu_custom_call.1} parent=55 // pred_check_branch
          %514 = sbr.rel (%p512) target = $region64
        $region63: #{tpu_custom_call.1} parent=55 // pred_region
          %p515 = scmp.lt.s32.totalorder %s29, 1
          %s516 = scalar_select %p515, %s29, 1
          %p517 = scmp.lt.s32.totalorder %s30, 0
          %s518 = scalar_select %p517, %s30, 0
          %s519 = sadd.s32 %s518, %s516
          %s520 = smul.addr %s519, 4
          %s521 = scalar_lea.vmem %s3, %s520
        $region64: #{tpu_custom_call.1} parent=55 // pred_fallthru
          _
      $region56: #{tpu_custom_call.1} parent=5 // pred_fallthru
        _
    $region6: #{tpu_custom_call.1} parent=1 // loop_footer
      %s20 = sadd.s32 1, %s16
    $region7: #{tpu_custom_call.1} parent=1 // loop_footer_branch
      %15 = sbr.rel target = $region3
    $region8: #{tpu_custom_call.1} parent=1 // loop_exit
      _
    %522 = vsyncpa [#allocation5], 1
    %s523 = scalar_lea.sflag [#allocation5], 1
    %524 = vsyncpa %s523, 1
    %525 = vsyncpa [#allocation7], 1
    %s526 = scalar_lea.sflag [#allocation7], 1
    %527 = vsyncpa %s526, 1

</llo_original>
